<compile_context>
chip_gen: v7x
topology: tpu7x:2x2x1
jax: 0.10.0
libtpu: 0.0.40
codegen_flags: <defaults>
</compile_context>

<pallas_src>
import functools

import numpy as np
import jax
import jax.numpy as jnp
from jax.experimental import pallas as pl
from jax.experimental.pallas import tpu as pltpu

# --- model hyperparameters (SimpleNet.__init__: k=3, grid_size=3, num=3) -----
K = 3                                   # spline order
INPUT_DIM = 8                           # budget feature dim
NUM = 3                                 # grid intervals before extension
GRID_PTS = NUM + 1 + 2 * K              # 10 knots after extend_grid
NCOEF = GRID_PTS - K - 1                # 6 spline coefficients per input dim
HIDDEN = 32
VOCAB = 48                              # Embedding(48, 8)
LANE = 128                              # TPU lane width
TBL_ROWS = 2 * INPUT_DIM * NCOEF        # 96: hi/lo bf16 halves stacked per coef block


def _make_grid():
    """Uniform extended knot grid as compile-time Python constants."""
    base = np.linspace(-1.0, 1.0, NUM + 1, dtype=np.float64)
    h = (base[-1] - base[0]) / (len(base) - 1)
    g = np.concatenate([base[0] - h * np.arange(K, 0, -1),
                        base,
                        base[-1] + h * np.arange(1, K + 1)])
    return [float(v) for v in g]


GRID = _make_grid()


def _level_consts():
    """Affine constants for the Cox-de Boor left factors.

    L_k[j](x) = (x - g[j]) / (g[j+k] - g[j]) = a*x + b.  The matching right
    factor equals 1 - L_k[j+1] exactly (same knot difference), so only one
    affine per knot per level is needed.  A zero knot difference would require
    torch's nan_to_num -> 0 convention instead of the identity; it never occurs
    for this uniform extended grid.
    """
    out = {}
    for k in range(1, K + 1):
        lst = []
        for j in range(GRID_PTS - k):
            d = GRID[j + k] - GRID[j]
            a = (1.0 / d) if d != 0.0 else 0.0
            lst.append((float(a), float(-GRID[j] * a)))
        out[k] = lst
    return out


LEVEL_CONSTS = _level_consts()


def _left_factors(x, k):
    """Left factors L_k[j] = a*x + b; the shared multiply is hoisted for the
    uniform grid (all denominators at a level are equal)."""
    consts = LEVEL_CONSTS[k]
    a0 = consts[0][0]
    if all(abs(a - a0) <= 1e-12 * abs(a0) for a, _ in consts):
        xa = x * a0
        return [xa + b for _, b in consts]
    return [x * a + b for a, b in consts]


# ----------------------------- the Pallas kernel -----------------------------
def _bc_spline_kernel(states_ref, budget_ref, table_ref, sb_ref, out_ref, *, chunk):
    tb = budget_ref.shape[-1]
    sb = sb_ref[0, 0]
    # one-hot row ids; chunk-loop invariant (CSE'd across chunks)
    rows = jax.lax.broadcasted_iota(jnp.int32, (VOCAB, chunk), 0)

    # Column-chunk loop, statically unrolled (== fori_loop with unroll=True):
    # keeps every temporary at (8, chunk) so the pyramid stays near-register-
    # resident instead of materializing tile-wide VMEM arrays.
    for c in range(tb // chunk):
        c0, c1 = c * chunk, (c + 1) * chunk
        x = budget_ref[:, c0:c1]                          # (8, chunk) f32, batch on lanes
        sid = states_ref[:, c0:c1]                        # (1, chunk) i32
        onehot = (rows == sid).astype(jnp.bfloat16)       # (48, chunk), direct bool->bf16

        # ---- cubic B-spline basis; uniform knots baked in --------------------
        ge = [x >= GRID[j] for j in range(GRID_PTS)]      # 10 shared comparisons
        mask0 = [jnp.logical_and(ge[j], jnp.logical_not(ge[j + 1]))
                 for j in range(GRID_PTS - 1)]            # order-0 kept as masks

        l1 = _left_factors(x, 1)
        basis = [jnp.where(mask0[j], l1[j], 0.0)
                 + jnp.where(mask0[j + 1], 1.0 - l1[j + 1], 0.0)
                 for j in range(GRID_PTS - 2)]            # order 1
        for k in range(2, K + 1):
            lk = _left_factors(x, k)
            basis = [lk[j] * basis[j] + (1.0 - lk[j + 1]) * basis[j + 1]
                     for j in range(GRID_PTS - 1 - k)]
        # basis: NCOEF arrays, each (8, chunk)

        # ---- SiLU base branch: sigmoid via tanh keeps the transcendental on EUP
        sig = jnp.tanh(x * 0.5) * 0.5 + 0.5
        y = (sb * x) * sig                                 # (8, chunk)

        # ---- per-slice coefficient gather: (16,48)x(48,chunk) MXU dots --------
        # table rows j*16+[0:8] = bf16 hi half, j*16+[8:16] = bf16 lo half of the
        # folded f32 coefficients (scale_sp already folded in); consumed
        # immediately so no (48, chunk) f32 intermediate stays live.
        for j in range(NCOEF):
            slab = table_ref[j * 2 * INPUT_DIM:(j + 1) * 2 * INPUT_DIM, :]   # (16, 48) bf16
            r = jnp.dot(slab, onehot, preferred_element_type=jnp.float32)    # (16, chunk)
            coef_j = r[:INPUT_DIM, :] + r[INPUT_DIM:, :]                     # (8, chunk)
            y = y + basis[j] * coef_j

        # sum over the 8 input dims (sublane reduce), clamp(min=0), lane-dense store
        out_ref[:, c0:c1] = jnp.maximum(jnp.sum(y, axis=0, keepdims=True), 0.0)


# ------------------------------ host-side glue -------------------------------
def fold_params(params):
    """Offline folding: Embedding -> Linear -> ReLU -> Linear and scale_sp become
    a single per-vocab coefficient table; its exact bf16 hi/lo halves are
    stacked per coefficient block into one (96, 48) bf16 LHS (row = j*16 + p*8 + i,
    p = hi/lo, i = input dim, col = vocab id)."""
    h = jnp.maximum(params["emb_table"] @ params["w1"] + params["b1"], 0.0)        # (48, 32)
    coef = h @ params["w2"] + params["b2"]                                         # (48, 48)
    coef = coef.reshape(VOCAB, INPUT_DIM, NCOEF) * params["scale_sp"][None, :, :]  # [v, i, j]
    tbl = jnp.transpose(coef, (2, 1, 0)).astype(jnp.float32)                       # (6, 8, 48)
    hi = tbl.astype(jnp.bfloat16)
    lo = (tbl - hi.astype(jnp.float32)).astype(jnp.bfloat16)
    table = jnp.concatenate([hi, lo], axis=1).reshape(TBL_ROWS, VOCAB)             # (96, 48)
    return dict(table=table, scale_base=params["scale_base"].astype(jnp.float32))


def _round_up(x, m):
    return ((x + m - 1) // m) * m


@functools.partial(jax.jit, static_argnames=("tile_b", "chunk", "budget_transposed"))
def bc_spline_forward(states, budget, folded, *, tile_b=8192, chunk=256,
                      budget_transposed=False):
    """states: (B,) int ids in [0, 48); budget: (B, 8) float, or (8, B) when
    budget_transposed=True (skips the wrapper-side transpose pass).  Returns (B, 1).

    tile_b: batch tile on the lane axis.  Per-tile VMEM is only ~80*tile_b bytes
    (double-buffered (8,tb)+(1,tb) inputs + (1,tb) output + 18 KiB table), so
    8192 is comfortable on every generation; 16384 is fine on v6e/v5e too.
    chunk: inner column-chunk width (multiple of 128); 256-512 keeps the spline
    pyramid register-resident.
    """
    assert tile_b % LANE == 0 and chunk % LANE == 0
    states = jnp.asarray(states).reshape(-1)
    if budget_transposed:
        assert budget.shape[0] == INPUT_DIM
        budget_t = budget.astype(jnp.float32)                    # (8, B): no extra HBM pass
        bsz = budget.shape[1]
    else:
        assert budget.shape[1] == INPUT_DIM
        bsz = budget.shape[0]
        budget_t = budget.astype(jnp.float32).T                  # one fused transpose(+pad) pass

    # cap the tile so modest batches still produce >= 2 grid steps (feeds both
    # v7x TensorCores); tb stays a multiple of 128.
    tb = min(tile_b, max(LANE, _round_up(bsz, 2 * LANE) // 2))
    bp = _round_up(bsz, tb)
    ck = min(chunk, tb)
    while tb % ck:
        ck -= LANE

    states_p = jnp.pad(states.astype(jnp.int32), (0, bp - bsz)).reshape(1, bp)
    budget_p = jnp.pad(budget_t, ((0, 0), (0, bp - bsz)))        # no-op when bp == bsz

    out = pl.pallas_call(
        functools.partial(_bc_spline_kernel, chunk=ck),
        out_shape=jax.ShapeDtypeStruct((1, bp), jnp.float32),
        grid=(bp // tb,),
        in_specs=[
            pl.BlockSpec((1, tb), lambda i: (0, i)),                       # state ids
            pl.BlockSpec((INPUT_DIM, tb), lambda i: (0, i)),               # budget (8, bp)
            pl.BlockSpec((TBL_ROWS, VOCAB), lambda i: (0, 0)),             # folded table (resident)
            pl.BlockSpec((1, 1), lambda i: (0, 0),
                         memory_space=pltpu.MemorySpace.SMEM),             # scale_base scalar
        ],
        out_specs=pl.BlockSpec((1, tb), lambda i: (0, i)),                 # lane-dense (1, tb)
        compiler_params=pltpu.CompilerParams(
            dimension_semantics=("parallel",),
            # generous: actual per-tile footprint is ~80*tb bytes (< 2 MiB at tb=16K)
            vmem_limit_bytes=32 * 1024 * 1024),
    )(states_p, budget_p, folded["table"], folded["scale_base"])

    return out[0, :bsz][:, None]                                           # (B, 1)


# ------------------------- synthetic params & reference ----------------------
def _make_params(seed=0):
    """Deterministic synthetic parameters matching SimpleNet's shapes."""
    key = jax.random.PRNGKey(seed)
    k_emb, k_w1, k_b1, k_w2, k_b2, k_sb = jax.random.split(key, 6)

    emb_table = jax.random.normal(k_emb, (VOCAB, INPUT_DIM), jnp.float32)      # Embedding(48,8)

    lim1 = 1.0 / np.sqrt(INPUT_DIM)                                            # Linear(8,32) as (in,out)
    w1 = jax.random.uniform(k_w1, (INPUT_DIM, HIDDEN), jnp.float32, -lim1, lim1)
    b1 = jax.random.uniform(k_b1, (1, HIDDEN), jnp.float32, -lim1, lim1)

    lim2 = 1.0 / np.sqrt(HIDDEN)                                               # Linear(32,48)
    w2 = jax.random.uniform(k_w2, (HIDDEN, INPUT_DIM * NCOEF), jnp.float32, -lim2, lim2)
    b2 = jax.random.uniform(k_b2, (1, INPUT_DIM * NCOEF), jnp.float32, -lim2, lim2)

    grid = jnp.asarray(np.tile(np.asarray(GRID, np.float32)[None, :], (INPUT_DIM, 1)))  # (8, 10)
    scale_base = jax.random.uniform(k_sb, (1, 1), jnp.float32, -1.0, 1.0)
    scale_sp = jnp.full((INPUT_DIM, 1), 1.0 / np.sqrt(INPUT_DIM), jnp.float32)

    return dict(emb_table=emb_table, w1=w1, b1=b1, w2=w2, b2=b2,
                grid=grid, scale_base=scale_base, scale_sp=scale_sp)


def _b_batch_ref(x, grid, k):
    """Pure-JAX mirror of torch B_batch (division form + nan_to_num)."""
    xe = x[:, :, None]
    g = grid[None, :, :]
    if k == 0:
        value = jnp.logical_and(xe >= g[:, :, :-1], xe < g[:, :, 1:]).astype(jnp.float32)
    else:
        b_km1 = _b_batch_ref(x, grid, k - 1)
        value = ((xe - g[:, :, :-(k + 1)])
                 / (g[:, :, k:-1] - g[:, :, :-(k + 1)]) * b_km1[:, :, :-1]
                 + (g[:, :, k + 1:] - xe)
                 / (g[:, :, k + 1:] - g[:, :, 1:-k]) * b_km1[:, :, 1:])
    return jnp.nan_to_num(value)


def _reference(states, budget, p):
    """Pure-JAX reference of the original (unfolded) forward pass."""
    emb = p["emb_table"][states]
    h = jnp.maximum(emb @ p["w1"] + p["b1"], 0.0)
    coef = (h @ p["w2"] + p["b2"]).reshape(-1, INPUT_DIM, NCOEF)
    bsp = _b_batch_ref(budget, p["grid"], K)
    y_spl = jnp.sum(bsp * coef, axis=-1)
    base = budget * jax.nn.sigmoid(budget)
    y = p["scale_base"][0, 0] * base + p["scale_sp"][:, 0][None, :] * y_spl
    return jnp.maximum(jnp.sum(y, axis=1, keepdims=True), 0.0)


if __name__ == "__main__":
    params = _make_params(seed=0)
    folded = fold_params(params)

    # small shapes consistent with the module: batch=8 ids, (8, 8) budgets
    key = jax.random.PRNGKey(0)
    k_s, k_b = jax.random.split(key)
    BATCH = 8
    states = jax.random.randint(k_s, (BATCH,), 0, VOCAB, dtype=jnp.int32)
    budget = jax.random.uniform(k_b, (BATCH, INPUT_DIM), jnp.float32, -1.0, 1.0)

    out = jax.block_until_ready(bc_spline_forward(states, budget, folded))
    ref = _reference(states, budget, params)
    assert out.shape == (BATCH, 1)
    assert np.allclose(np.asarray(out), np.asarray(ref), atol=1e-4, rtol=1e-4), \
        float(np.max(np.abs(np.asarray(out) - np.asarray(ref))))

    # multi-tile grid path with a ragged batch (zero-padded trailing lanes)
    B2 = 300
    k_s2, k_b2 = jax.random.split(jax.random.PRNGKey(1))
    states2 = jax.random.randint(k_s2, (B2,), 0, VOCAB, dtype=jnp.int32)
    budget2 = jax.random.uniform(k_b2, (B2, INPUT_DIM), jnp.float32, -1.0, 1.0)
    out2 = jax.block_until_ready(bc_spline_forward(states2, budget2, folded, tile_b=128))
    ref2 = _reference(states2, budget2, params)
    assert np.allclose(np.asarray(out2), np.asarray(ref2), atol=1e-4, rtol=1e-4)

    # pre-transposed budget (no wrapper transpose pass) + multi-chunk inner loop
    B3 = 1024
    k_s3, k_b3 = jax.random.split(jax.random.PRNGKey(2))
    states3 = jax.random.randint(k_s3, (B3,), 0, VOCAB, dtype=jnp.int32)
    budget3_t = jax.random.uniform(k_b3, (INPUT_DIM, B3), jnp.float32, -1.0, 1.0)
    out3 = jax.block_until_ready(
        bc_spline_forward(states3, budget3_t, folded, tile_b=512, chunk=256,
                          budget_transposed=True))
    ref3 = _reference(states3, budget3_t.T, params)
    assert np.allclose(np.asarray(out3), np.asarray(ref3), atol=1e-4, rtol=1e-4)

    # TODO(synk): BC_SPLINE's training step (Adam/MSE), LinearLR scheduler and
    # .pt/.pkl/jit save-load have no Pallas equivalent; only the inference
    # forward pass is implemented here.
    print("KERNEL_OK")
</pallas_src>

<mosaic_0001>
module attributes {stable_mosaic.version = 11 : i64} {
  func.func @_bc_spline_kernel(%arg0: i32, %arg1: memref<1x128xi32, #tpu.memory_space<vmem>>, %arg2: memref<8x128xf32, #tpu.memory_space<vmem>>, %arg3: memref<96x48xbf16, #tpu.memory_space<vmem>>, %arg4: memref<1x1xf32, #tpu.memory_space<smem>>, %arg5: memref<1x128xf32, #tpu.memory_space<vmem>>) attributes {dimension_semantics = [#tpu.dimension_semantics<parallel>], iteration_bounds = array<i64: 1>, scalar_prefetch = 0 : i64, scratch_operands = 0 : i64, tpu.core_type = #tpu.core_type<tc>, window_params = [{transform_indices = @transform_0, window_bounds = array<i64: 1, 128>}, {transform_indices = @transform_1, window_bounds = array<i64: 8, 128>}, {pipeline_mode = #tpu.pipeline_mode<synchronous>, transform_indices = @transform_2, window_bounds = array<i64: 96, 48>}, {transform_indices = @transform_3, window_bounds = array<i64: 1, 1>}, {transform_indices = @transform_4, window_bounds = array<i64: 1, 128>}]} {
    %c0 = arith.constant 0 : index
    %c0_0 = arith.constant 0 : index
    %0 = memref.load %arg4[%c0, %c0_0] : memref<1x1xf32, #tpu.memory_space<smem>>
    %1 = tpu.iota {dimensions = array<i32: 0>} : vector<48x128xi32>
    %c0_1 = arith.constant 0 : index
    %c0_2 = arith.constant 0 : index
    %2 = vector.load %arg2[%c0_1, %c0_2] : memref<8x128xf32, #tpu.memory_space<vmem>>, vector<8x128xf32>
    %c0_3 = arith.constant 0 : index
    %c0_4 = arith.constant 0 : index
    %3 = vector.load %arg1[%c0_3, %c0_4] : memref<1x128xi32, #tpu.memory_space<vmem>>, vector<1x128xi32>
    %4 = vector.broadcast %3 : vector<1x128xi32> to vector<48x128xi32>
    %5 = arith.cmpi eq, %1, %4 : vector<48x128xi32>
    %6 = arith.extui %5 : vector<48x128xi1> to vector<48x128xi32>
    %7 = arith.sitofp %6 : vector<48x128xi32> to vector<48x128xf32>
    %8 = arith.truncf %7 : vector<48x128xf32> to vector<48x128xbf16>
    %cst = arith.constant -3.000000e+00 : f32
    %9 = vector.broadcast %cst : f32 to vector<8x128xf32>
    %10 = arith.cmpf oge, %2, %9 : vector<8x128xf32>
    %cst_5 = arith.constant -2.33333325 : f32
    %11 = vector.broadcast %cst_5 : f32 to vector<8x128xf32>
    %12 = arith.cmpf oge, %2, %11 : vector<8x128xf32>
    %cst_6 = arith.constant -1.66666663 : f32
    %13 = vector.broadcast %cst_6 : f32 to vector<8x128xf32>
    %14 = arith.cmpf oge, %2, %13 : vector<8x128xf32>
    %cst_7 = arith.constant -1.000000e+00 : f32
    %15 = vector.broadcast %cst_7 : f32 to vector<8x128xf32>
    %16 = arith.cmpf oge, %2, %15 : vector<8x128xf32>
    %cst_8 = arith.constant -0.333333343 : f32
    %17 = vector.broadcast %cst_8 : f32 to vector<8x128xf32>
    %18 = arith.cmpf oge, %2, %17 : vector<8x128xf32>
    %cst_9 = arith.constant 0.333333343 : f32
    %19 = vector.broadcast %cst_9 : f32 to vector<8x128xf32>
    %20 = arith.cmpf oge, %2, %19 : vector<8x128xf32>
    %cst_10 = arith.constant 1.000000e+00 : f32
    %21 = vector.broadcast %cst_10 : f32 to vector<8x128xf32>
    %22 = arith.cmpf oge, %2, %21 : vector<8x128xf32>
    %cst_11 = arith.constant 1.66666663 : f32
    %23 = vector.broadcast %cst_11 : f32 to vector<8x128xf32>
    %24 = arith.cmpf oge, %2, %23 : vector<8x128xf32>
    %cst_12 = arith.constant 2.33333325 : f32
    %25 = vector.broadcast %cst_12 : f32 to vector<8x128xf32>
    %26 = arith.cmpf oge, %2, %25 : vector<8x128xf32>
    %cst_13 = arith.constant 3.000000e+00 : f32
    %27 = vector.broadcast %cst_13 : f32 to vector<8x128xf32>
    %28 = arith.cmpf oge, %2, %27 : vector<8x128xf32>
    %cst_14 = arith.constant dense<true> : vector<8x128xi1>
    %29 = arith.xori %12, %cst_14 : vector<8x128xi1>
    %30 = arith.andi %10, %29 : vector<8x128xi1>
    %cst_15 = arith.constant dense<true> : vector<8x128xi1>
    %31 = arith.xori %14, %cst_15 : vector<8x128xi1>
    %32 = arith.andi %12, %31 : vector<8x128xi1>
    %cst_16 = arith.constant dense<true> : vector<8x128xi1>
    %33 = arith.xori %16, %cst_16 : vector<8x128xi1>
    %34 = arith.andi %14, %33 : vector<8x128xi1>
    %cst_17 = arith.constant dense<true> : vector<8x128xi1>
    %35 = arith.xori %18, %cst_17 : vector<8x128xi1>
    %36 = arith.andi %16, %35 : vector<8x128xi1>
    %cst_18 = arith.constant dense<true> : vector<8x128xi1>
    %37 = arith.xori %20, %cst_18 : vector<8x128xi1>
    %38 = arith.andi %18, %37 : vector<8x128xi1>
    %cst_19 = arith.constant dense<true> : vector<8x128xi1>
    %39 = arith.xori %22, %cst_19 : vector<8x128xi1>
    %40 = arith.andi %20, %39 : vector<8x128xi1>
    %cst_20 = arith.constant dense<true> : vector<8x128xi1>
    %41 = arith.xori %24, %cst_20 : vector<8x128xi1>
    %42 = arith.andi %22, %41 : vector<8x128xi1>
    %cst_21 = arith.constant dense<true> : vector<8x128xi1>
    %43 = arith.xori %26, %cst_21 : vector<8x128xi1>
    %44 = arith.andi %24, %43 : vector<8x128xi1>
    %cst_22 = arith.constant dense<true> : vector<8x128xi1>
    %45 = arith.xori %28, %cst_22 : vector<8x128xi1>
    %46 = arith.andi %26, %45 : vector<8x128xi1>
    %cst_23 = arith.constant 1.500000e+00 : f32
    %47 = vector.broadcast %cst_23 : f32 to vector<8x128xf32>
    %48 = arith.mulf %2, %47 : vector<8x128xf32>
    %cst_24 = arith.constant 4.500000e+00 : f32
    %49 = vector.broadcast %cst_24 : f32 to vector<8x128xf32>
    %50 = arith.addf %48, %49 : vector<8x128xf32>
    %cst_25 = arith.constant 3.500000e+00 : f32
    %51 = vector.broadcast %cst_25 : f32 to vector<8x128xf32>
    %52 = arith.addf %48, %51 : vector<8x128xf32>
    %cst_26 = arith.constant 2.500000e+00 : f32
    %53 = vector.broadcast %cst_26 : f32 to vector<8x128xf32>
    %54 = arith.addf %48, %53 : vector<8x128xf32>
    %cst_27 = arith.constant 1.500000e+00 : f32
    %55 = vector.broadcast %cst_27 : f32 to vector<8x128xf32>
    %56 = arith.addf %48, %55 : vector<8x128xf32>
    %cst_28 = arith.constant 5.000000e-01 : f32
    %57 = vector.broadcast %cst_28 : f32 to vector<8x128xf32>
    %58 = arith.addf %48, %57 : vector<8x128xf32>
    %cst_29 = arith.constant -5.000000e-01 : f32
    %59 = vector.broadcast %cst_29 : f32 to vector<8x128xf32>
    %60 = arith.addf %48, %59 : vector<8x128xf32>
    %cst_30 = arith.constant -1.500000e+00 : f32
    %61 = vector.broadcast %cst_30 : f32 to vector<8x128xf32>
    %62 = arith.addf %48, %61 : vector<8x128xf32>
    %cst_31 = arith.constant -2.500000e+00 : f32
    %63 = vector.broadcast %cst_31 : f32 to vector<8x128xf32>
    %64 = arith.addf %48, %63 : vector<8x128xf32>
    %cst_32 = arith.constant -3.500000e+00 : f32
    %65 = vector.broadcast %cst_32 : f32 to vector<8x128xf32>
    %66 = arith.addf %48, %65 : vector<8x128xf32>
    %cst_33 = arith.constant 0.000000e+00 : f32
    %67 = vector.broadcast %cst_33 : f32 to vector<8x128xf32>
    %68 = arith.select %30, %50, %67 : vector<8x128xi1>, vector<8x128xf32>
    %cst_34 = arith.constant 1.000000e+00 : f32
    %69 = vector.broadcast %cst_34 : f32 to vector<8x128xf32>
    %70 = arith.subf %69, %52 : vector<8x128xf32>
    %cst_35 = arith.constant 0.000000e+00 : f32
    %71 = vector.broadcast %cst_35 : f32 to vector<8x128xf32>
    %72 = arith.select %32, %70, %71 : vector<8x128xi1>, vector<8x128xf32>
    %73 = arith.addf %68, %72 : vector<8x128xf32>
    %cst_36 = arith.constant 0.000000e+00 : f32
    %74 = vector.broadcast %cst_36 : f32 to vector<8x128xf32>
    %75 = arith.select %32, %52, %74 : vector<8x128xi1>, vector<8x128xf32>
    %cst_37 = arith.constant 1.000000e+00 : f32
    %76 = vector.broadcast %cst_37 : f32 to vector<8x128xf32>
    %77 = arith.subf %76, %54 : vector<8x128xf32>
    %cst_38 = arith.constant 0.000000e+00 : f32
    %78 = vector.broadcast %cst_38 : f32 to vector<8x128xf32>
    %79 = arith.select %34, %77, %78 : vector<8x128xi1>, vector<8x128xf32>
    %80 = arith.addf %75, %79 : vector<8x128xf32>
    %cst_39 = arith.constant 0.000000e+00 : f32
    %81 = vector.broadcast %cst_39 : f32 to vector<8x128xf32>
    %82 = arith.select %34, %54, %81 : vector<8x128xi1>, vector<8x128xf32>
    %cst_40 = arith.constant 1.000000e+00 : f32
    %83 = vector.broadcast %cst_40 : f32 to vector<8x128xf32>
    %84 = arith.subf %83, %56 : vector<8x128xf32>
    %cst_41 = arith.constant 0.000000e+00 : f32
    %85 = vector.broadcast %cst_41 : f32 to vector<8x128xf32>
    %86 = arith.select %36, %84, %85 : vector<8x128xi1>, vector<8x128xf32>
    %87 = arith.addf %82, %86 : vector<8x128xf32>
    %cst_42 = arith.constant 0.000000e+00 : f32
    %88 = vector.broadcast %cst_42 : f32 to vector<8x128xf32>
    %89 = arith.select %36, %56, %88 : vector<8x128xi1>, vector<8x128xf32>
    %cst_43 = arith.constant 1.000000e+00 : f32
    %90 = vector.broadcast %cst_43 : f32 to vector<8x128xf32>
    %91 = arith.subf %90, %58 : vector<8x128xf32>
    %cst_44 = arith.constant 0.000000e+00 : f32
    %92 = vector.broadcast %cst_44 : f32 to vector<8x128xf32>
    %93 = arith.select %38, %91, %92 : vector<8x128xi1>, vector<8x128xf32>
    %94 = arith.addf %89, %93 : vector<8x128xf32>
    %cst_45 = arith.constant 0.000000e+00 : f32
    %95 = vector.broadcast %cst_45 : f32 to vector<8x128xf32>
    %96 = arith.select %38, %58, %95 : vector<8x128xi1>, vector<8x128xf32>
    %cst_46 = arith.constant 1.000000e+00 : f32
    %97 = vector.broadcast %cst_46 : f32 to vector<8x128xf32>
    %98 = arith.subf %97, %60 : vector<8x128xf32>
    %cst_47 = arith.constant 0.000000e+00 : f32
    %99 = vector.broadcast %cst_47 : f32 to vector<8x128xf32>
    %100 = arith.select %40, %98, %99 : vector<8x128xi1>, vector<8x128xf32>
    %101 = arith.addf %96, %100 : vector<8x128xf32>
    %cst_48 = arith.constant 0.000000e+00 : f32
    %102 = vector.broadcast %cst_48 : f32 to vector<8x128xf32>
    %103 = arith.select %40, %60, %102 : vector<8x128xi1>, vector<8x128xf32>
    %cst_49 = arith.constant 1.000000e+00 : f32
    %104 = vector.broadcast %cst_49 : f32 to vector<8x128xf32>
    %105 = arith.subf %104, %62 : vector<8x128xf32>
    %cst_50 = arith.constant 0.000000e+00 : f32
    %106 = vector.broadcast %cst_50 : f32 to vector<8x128xf32>
    %107 = arith.select %42, %105, %106 : vector<8x128xi1>, vector<8x128xf32>
    %108 = arith.addf %103, %107 : vector<8x128xf32>
    %cst_51 = arith.constant 0.000000e+00 : f32
    %109 = vector.broadcast %cst_51 : f32 to vector<8x128xf32>
    %110 = arith.select %42, %62, %109 : vector<8x128xi1>, vector<8x128xf32>
    %cst_52 = arith.constant 1.000000e+00 : f32
    %111 = vector.broadcast %cst_52 : f32 to vector<8x128xf32>
    %112 = arith.subf %111, %64 : vector<8x128xf32>
    %cst_53 = arith.constant 0.000000e+00 : f32
    %113 = vector.broadcast %cst_53 : f32 to vector<8x128xf32>
    %114 = arith.select %44, %112, %113 : vector<8x128xi1>, vector<8x128xf32>
    %115 = arith.addf %110, %114 : vector<8x128xf32>
    %cst_54 = arith.constant 0.000000e+00 : f32
    %116 = vector.broadcast %cst_54 : f32 to vector<8x128xf32>
    %117 = arith.select %44, %64, %116 : vector<8x128xi1>, vector<8x128xf32>
    %cst_55 = arith.constant 1.000000e+00 : f32
    %118 = vector.broadcast %cst_55 : f32 to vector<8x128xf32>
    %119 = arith.subf %118, %66 : vector<8x128xf32>
    %cst_56 = arith.constant 0.000000e+00 : f32
    %120 = vector.broadcast %cst_56 : f32 to vector<8x128xf32>
    %121 = arith.select %46, %119, %120 : vector<8x128xi1>, vector<8x128xf32>
    %122 = arith.addf %117, %121 : vector<8x128xf32>
    %cst_57 = arith.constant 7.500000e-01 : f32
    %123 = vector.broadcast %cst_57 : f32 to vector<8x128xf32>
    %124 = arith.mulf %2, %123 : vector<8x128xf32>
    %cst_58 = arith.constant 2.250000e+00 : f32
    %125 = vector.broadcast %cst_58 : f32 to vector<8x128xf32>
    %126 = arith.addf %124, %125 : vector<8x128xf32>
    %cst_59 = arith.constant 1.750000e+00 : f32
    %127 = vector.broadcast %cst_59 : f32 to vector<8x128xf32>
    %128 = arith.addf %124, %127 : vector<8x128xf32>
    %cst_60 = arith.constant 1.250000e+00 : f32
    %129 = vector.broadcast %cst_60 : f32 to vector<8x128xf32>
    %130 = arith.addf %124, %129 : vector<8x128xf32>
    %cst_61 = arith.constant 7.500000e-01 : f32
    %131 = vector.broadcast %cst_61 : f32 to vector<8x128xf32>
    %132 = arith.addf %124, %131 : vector<8x128xf32>
    %cst_62 = arith.constant 2.500000e-01 : f32
    %133 = vector.broadcast %cst_62 : f32 to vector<8x128xf32>
    %134 = arith.addf %124, %133 : vector<8x128xf32>
    %cst_63 = arith.constant -2.500000e-01 : f32
    %135 = vector.broadcast %cst_63 : f32 to vector<8x128xf32>
    %136 = arith.addf %124, %135 : vector<8x128xf32>
    %cst_64 = arith.constant -7.500000e-01 : f32
    %137 = vector.broadcast %cst_64 : f32 to vector<8x128xf32>
    %138 = arith.addf %124, %137 : vector<8x128xf32>
    %cst_65 = arith.constant -1.250000e+00 : f32
    %139 = vector.broadcast %cst_65 : f32 to vector<8x128xf32>
    %140 = arith.addf %124, %139 : vector<8x128xf32>
    %141 = arith.mulf %126, %73 : vector<8x128xf32>
    %cst_66 = arith.constant 1.000000e+00 : f32
    %142 = vector.broadcast %cst_66 : f32 to vector<8x128xf32>
    %143 = arith.subf %142, %128 : vector<8x128xf32>
    %144 = arith.mulf %143, %80 : vector<8x128xf32>
    %145 = arith.addf %141, %144 : vector<8x128xf32>
    %146 = arith.mulf %128, %80 : vector<8x128xf32>
    %cst_67 = arith.constant 1.000000e+00 : f32
    %147 = vector.broadcast %cst_67 : f32 to vector<8x128xf32>
    %148 = arith.subf %147, %130 : vector<8x128xf32>
    %149 = arith.mulf %148, %87 : vector<8x128xf32>
    %150 = arith.addf %146, %149 : vector<8x128xf32>
    %151 = arith.mulf %130, %87 : vector<8x128xf32>
    %cst_68 = arith.constant 1.000000e+00 : f32
    %152 = vector.broadcast %cst_68 : f32 to vector<8x128xf32>
    %153 = arith.subf %152, %132 : vector<8x128xf32>
    %154 = arith.mulf %153, %94 : vector<8x128xf32>
    %155 = arith.addf %151, %154 : vector<8x128xf32>
    %156 = arith.mulf %132, %94 : vector<8x128xf32>
    %cst_69 = arith.constant 1.000000e+00 : f32
    %157 = vector.broadcast %cst_69 : f32 to vector<8x128xf32>
    %158 = arith.subf %157, %134 : vector<8x128xf32>
    %159 = arith.mulf %158, %101 : vector<8x128xf32>
    %160 = arith.addf %156, %159 : vector<8x128xf32>
    %161 = arith.mulf %134, %101 : vector<8x128xf32>
    %cst_70 = arith.constant 1.000000e+00 : f32
    %162 = vector.broadcast %cst_70 : f32 to vector<8x128xf32>
    %163 = arith.subf %162, %136 : vector<8x128xf32>
    %164 = arith.mulf %163, %108 : vector<8x128xf32>
    %165 = arith.addf %161, %164 : vector<8x128xf32>
    %166 = arith.mulf %136, %108 : vector<8x128xf32>
    %cst_71 = arith.constant 1.000000e+00 : f32
    %167 = vector.broadcast %cst_71 : f32 to vector<8x128xf32>
    %168 = arith.subf %167, %138 : vector<8x128xf32>
    %169 = arith.mulf %168, %115 : vector<8x128xf32>
    %170 = arith.addf %166, %169 : vector<8x128xf32>
    %171 = arith.mulf %138, %115 : vector<8x128xf32>
    %cst_72 = arith.constant 1.000000e+00 : f32
    %172 = vector.broadcast %cst_72 : f32 to vector<8x128xf32>
    %173 = arith.subf %172, %140 : vector<8x128xf32>
    %174 = arith.mulf %173, %122 : vector<8x128xf32>
    %175 = arith.addf %171, %174 : vector<8x128xf32>
    %cst_73 = arith.constant 5.000000e-01 : f32
    %176 = vector.broadcast %cst_73 : f32 to vector<8x128xf32>
    %177 = arith.mulf %2, %176 : vector<8x128xf32>
    %cst_74 = arith.constant 1.500000e+00 : f32
    %178 = vector.broadcast %cst_74 : f32 to vector<8x128xf32>
    %179 = arith.addf %177, %178 : vector<8x128xf32>
    %cst_75 = arith.constant 1.16666663 : f32
    %180 = vector.broadcast %cst_75 : f32 to vector<8x128xf32>
    %181 = arith.addf %177, %180 : vector<8x128xf32>
    %cst_76 = arith.constant 0.833333313 : f32
    %182 = vector.broadcast %cst_76 : f32 to vector<8x128xf32>
    %183 = arith.addf %177, %182 : vector<8x128xf32>
    %cst_77 = arith.constant 5.000000e-01 : f32
    %184 = vector.broadcast %cst_77 : f32 to vector<8x128xf32>
    %185 = arith.addf %177, %184 : vector<8x128xf32>
    %cst_78 = arith.constant 0.166666672 : f32
    %186 = vector.broadcast %cst_78 : f32 to vector<8x128xf32>
    %187 = arith.addf %177, %186 : vector<8x128xf32>
    %cst_79 = arith.constant -0.166666672 : f32
    %188 = vector.broadcast %cst_79 : f32 to vector<8x128xf32>
    %189 = arith.addf %177, %188 : vector<8x128xf32>
    %cst_80 = arith.constant -5.000000e-01 : f32
    %190 = vector.broadcast %cst_80 : f32 to vector<8x128xf32>
    %191 = arith.addf %177, %190 : vector<8x128xf32>
    %192 = arith.mulf %179, %145 : vector<8x128xf32>
    %cst_81 = arith.constant 1.000000e+00 : f32
    %193 = vector.broadcast %cst_81 : f32 to vector<8x128xf32>
    %194 = arith.subf %193, %181 : vector<8x128xf32>
    %195 = arith.mulf %194, %150 : vector<8x128xf32>
    %196 = arith.addf %192, %195 : vector<8x128xf32>
    %197 = arith.mulf %181, %150 : vector<8x128xf32>
    %cst_82 = arith.constant 1.000000e+00 : f32
    %198 = vector.broadcast %cst_82 : f32 to vector<8x128xf32>
    %199 = arith.subf %198, %183 : vector<8x128xf32>
    %200 = arith.mulf %199, %155 : vector<8x128xf32>
    %201 = arith.addf %197, %200 : vector<8x128xf32>
    %202 = arith.mulf %183, %155 : vector<8x128xf32>
    %cst_83 = arith.constant 1.000000e+00 : f32
    %203 = vector.broadcast %cst_83 : f32 to vector<8x128xf32>
    %204 = arith.subf %203, %185 : vector<8x128xf32>
    %205 = arith.mulf %204, %160 : vector<8x128xf32>
    %206 = arith.addf %202, %205 : vector<8x128xf32>
    %207 = arith.mulf %185, %160 : vector<8x128xf32>
    %cst_84 = arith.constant 1.000000e+00 : f32
    %208 = vector.broadcast %cst_84 : f32 to vector<8x128xf32>
    %209 = arith.subf %208, %187 : vector<8x128xf32>
    %210 = arith.mulf %209, %165 : vector<8x128xf32>
    %211 = arith.addf %207, %210 : vector<8x128xf32>
    %212 = arith.mulf %187, %165 : vector<8x128xf32>
    %cst_85 = arith.constant 1.000000e+00 : f32
    %213 = vector.broadcast %cst_85 : f32 to vector<8x128xf32>
    %214 = arith.subf %213, %189 : vector<8x128xf32>
    %215 = arith.mulf %214, %170 : vector<8x128xf32>
    %216 = arith.addf %212, %215 : vector<8x128xf32>
    %217 = arith.mulf %189, %170 : vector<8x128xf32>
    %cst_86 = arith.constant 1.000000e+00 : f32
    %218 = vector.broadcast %cst_86 : f32 to vector<8x128xf32>
    %219 = arith.subf %218, %191 : vector<8x128xf32>
    %220 = arith.mulf %219, %175 : vector<8x128xf32>
    %221 = arith.addf %217, %220 : vector<8x128xf32>
    %cst_87 = arith.constant 5.000000e-01 : f32
    %222 = vector.broadcast %cst_87 : f32 to vector<8x128xf32>
    %223 = arith.mulf %2, %222 : vector<8x128xf32>
    %224 = math.tanh %223 : vector<8x128xf32>
    %cst_88 = arith.constant 5.000000e-01 : f32
    %225 = vector.broadcast %cst_88 : f32 to vector<8x128xf32>
    %226 = arith.mulf %224, %225 : vector<8x128xf32>
    %cst_89 = arith.constant 5.000000e-01 : f32
    %227 = vector.broadcast %cst_89 : f32 to vector<8x128xf32>
    %228 = arith.addf %226, %227 : vector<8x128xf32>
    %229 = vector.broadcast %0 : f32 to vector<8x128xf32>
    %230 = arith.mulf %229, %2 : vector<8x128xf32>
    %231 = arith.mulf %230, %228 : vector<8x128xf32>
    %c0_90 = arith.constant 0 : index
    %c0_91 = arith.constant 0 : index
    %232 = vector.load %arg3[%c0_90, %c0_91] : memref<96x48xbf16, #tpu.memory_space<vmem>>, vector<16x48xbf16>
    %cst_92 = arith.constant dense<0.000000e+00> : vector<16x128xf32>
    %233 = tpu.matmul %232, %8, %cst_92 {dimension_numbers = #tpu.dot_dimension_numbers<[1], [0], [0], [1], [0, 0, 1, 1], [], []>} : vector<16x48xbf16>, vector<48x128xbf16>, vector<16x128xf32> -> vector<16x128xf32>
    %234 = vector.extract_strided_slice %233 {offsets = [0, 0], sizes = [8, 128], strides = [1, 1]} : vector<16x128xf32> to vector<8x128xf32>
    %235 = vector.extract_strided_slice %233 {offsets = [8, 0], sizes = [8, 128], strides = [1, 1]} : vector<16x128xf32> to vector<8x128xf32>
    %236 = arith.addf %234, %235 : vector<8x128xf32>
    %237 = arith.mulf %196, %236 : vector<8x128xf32>
    %238 = arith.addf %231, %237 : vector<8x128xf32>
    %c16 = arith.constant 16 : index
    %c0_93 = arith.constant 0 : index
    %239 = vector.load %arg3[%c16, %c0_93] : memref<96x48xbf16, #tpu.memory_space<vmem>>, vector<16x48xbf16>
    %cst_94 = arith.constant dense<0.000000e+00> : vector<16x128xf32>
    %240 = tpu.matmul %239, %8, %cst_94 {dimension_numbers = #tpu.dot_dimension_numbers<[1], [0], [0], [1], [0, 0, 1, 1], [], []>} : vector<16x48xbf16>, vector<48x128xbf16>, vector<16x128xf32> -> vector<16x128xf32>
    %241 = vector.extract_strided_slice %240 {offsets = [0, 0], sizes = [8, 128], strides = [1, 1]} : vector<16x128xf32> to vector<8x128xf32>
    %242 = vector.extract_strided_slice %240 {offsets = [8, 0], sizes = [8, 128], strides = [1, 1]} : vector<16x128xf32> to vector<8x128xf32>
    %243 = arith.addf %241, %242 : vector<8x128xf32>
    %244 = arith.mulf %201, %243 : vector<8x128xf32>
    %245 = arith.addf %238, %244 : vector<8x128xf32>
    %c32 = arith.constant 32 : index
    %c0_95 = arith.constant 0 : index
    %246 = vector.load %arg3[%c32, %c0_95] : memref<96x48xbf16, #tpu.memory_space<vmem>>, vector<16x48xbf16>
    %cst_96 = arith.constant dense<0.000000e+00> : vector<16x128xf32>
    %247 = tpu.matmul %246, %8, %cst_96 {dimension_numbers = #tpu.dot_dimension_numbers<[1], [0], [0], [1], [0, 0, 1, 1], [], []>} : vector<16x48xbf16>, vector<48x128xbf16>, vector<16x128xf32> -> vector<16x128xf32>
    %248 = vector.extract_strided_slice %247 {offsets = [0, 0], sizes = [8, 128], strides = [1, 1]} : vector<16x128xf32> to vector<8x128xf32>
    %249 = vector.extract_strided_slice %247 {offsets = [8, 0], sizes = [8, 128], strides = [1, 1]} : vector<16x128xf32> to vector<8x128xf32>
    %250 = arith.addf %248, %249 : vector<8x128xf32>
    %251 = arith.mulf %206, %250 : vector<8x128xf32>
    %252 = arith.addf %245, %251 : vector<8x128xf32>
    %c48 = arith.constant 48 : index
    %c0_97 = arith.constant 0 : index
    %253 = vector.load %arg3[%c48, %c0_97] : memref<96x48xbf16, #tpu.memory_space<vmem>>, vector<16x48xbf16>
    %cst_98 = arith.constant dense<0.000000e+00> : vector<16x128xf32>
    %254 = tpu.matmul %253, %8, %cst_98 {dimension_numbers = #tpu.dot_dimension_numbers<[1], [0], [0], [1], [0, 0, 1, 1], [], []>} : vector<16x48xbf16>, vector<48x128xbf16>, vector<16x128xf32> -> vector<16x128xf32>
    %255 = vector.extract_strided_slice %254 {offsets = [0, 0], sizes = [8, 128], strides = [1, 1]} : vector<16x128xf32> to vector<8x128xf32>
    %256 = vector.extract_strided_slice %254 {offsets = [8, 0], sizes = [8, 128], strides = [1, 1]} : vector<16x128xf32> to vector<8x128xf32>
    %257 = arith.addf %255, %256 : vector<8x128xf32>
    %258 = arith.mulf %211, %257 : vector<8x128xf32>
    %259 = arith.addf %252, %258 : vector<8x128xf32>
    %c64 = arith.constant 64 : index
    %c0_99 = arith.constant 0 : index
    %260 = vector.load %arg3[%c64, %c0_99] : memref<96x48xbf16, #tpu.memory_space<vmem>>, vector<16x48xbf16>
    %cst_100 = arith.constant dense<0.000000e+00> : vector<16x128xf32>
    %261 = tpu.matmul %260, %8, %cst_100 {dimension_numbers = #tpu.dot_dimension_numbers<[1], [0], [0], [1], [0, 0, 1, 1], [], []>} : vector<16x48xbf16>, vector<48x128xbf16>, vector<16x128xf32> -> vector<16x128xf32>
    %262 = vector.extract_strided_slice %261 {offsets = [0, 0], sizes = [8, 128], strides = [1, 1]} : vector<16x128xf32> to vector<8x128xf32>
    %263 = vector.extract_strided_slice %261 {offsets = [8, 0], sizes = [8, 128], strides = [1, 1]} : vector<16x128xf32> to vector<8x128xf32>
    %264 = arith.addf %262, %263 : vector<8x128xf32>
    %265 = arith.mulf %216, %264 : vector<8x128xf32>
    %266 = arith.addf %259, %265 : vector<8x128xf32>
    %c80 = arith.constant 80 : index
    %c0_101 = arith.constant 0 : index
    %267 = vector.load %arg3[%c80, %c0_101] : memref<96x48xbf16, #tpu.memory_space<vmem>>, vector<16x48xbf16>
    %cst_102 = arith.constant dense<0.000000e+00> : vector<16x128xf32>
    %268 = tpu.matmul %267, %8, %cst_102 {dimension_numbers = #tpu.dot_dimension_numbers<[1], [0], [0], [1], [0, 0, 1, 1], [], []>} : vector<16x48xbf16>, vector<48x128xbf16>, vector<16x128xf32> -> vector<16x128xf32>
    %269 = vector.extract_strided_slice %268 {offsets = [0, 0], sizes = [8, 128], strides = [1, 1]} : vector<16x128xf32> to vector<8x128xf32>
    %270 = vector.extract_strided_slice %268 {offsets = [8, 0], sizes = [8, 128], strides = [1, 1]} : vector<16x128xf32> to vector<8x128xf32>
    %271 = arith.addf %269, %270 : vector<8x128xf32>
    %272 = arith.mulf %221, %271 : vector<8x128xf32>
    %273 = arith.addf %266, %272 : vector<8x128xf32>
    %cst_103 = arith.constant dense<0.000000e+00> : vector<128xf32>
    %274 = vector.multi_reduction <add>, %273, %cst_103 [0] : vector<8x128xf32> to vector<128xf32>
    %275 = vector.shape_cast %274 : vector<128xf32> to vector<1x128xf32>
    %cst_104 = arith.constant 0.000000e+00 : f32
    %276 = vector.broadcast %cst_104 : f32 to vector<1x128xf32>
    %277 = arith.maximumf %275, %276 : vector<1x128xf32>
    %c0_105 = arith.constant 0 : index
    %c0_106 = arith.constant 0 : index
    %278 = vector.load %arg5[%c0_105, %c0_106] : memref<1x128xf32, #tpu.memory_space<vmem>>, vector<1x128xf32>
    tpu.vector_store %arg5[%c0_105, %c0_106], %277 {strides = array<i32>} : memref<1x128xf32, #tpu.memory_space<vmem>>, vector<1x128xf32>,
    return
  }
  func.func @transform_0(%arg0: i32) -> (i32, i32) {
    %c0_i32 = arith.constant 0 : i32
    %c0_i32_0 = arith.constant 0 : i32
    return %c0_i32, %arg0 : i32, i32
  }
  func.func @transform_1(%arg0: i32) -> (i32, i32) {
    %c0_i32 = arith.constant 0 : i32
    %c0_i32_0 = arith.constant 0 : i32
    return %c0_i32, %arg0 : i32, i32
  }
  func.func @transform_2(%arg0: i32) -> (i32, i32) {
    %c0_i32 = arith.constant 0 : i32
    %c0_i32_0 = arith.constant 0 : i32
    %c0_i32_1 = arith.constant 0 : i32
    return %c0_i32, %c0_i32_0 : i32, i32
  }
  func.func @transform_3(%arg0: i32) -> (i32, i32) {
    %c0_i32 = arith.constant 0 : i32
    %c0_i32_0 = arith.constant 0 : i32
    %c0_i32_1 = arith.constant 0 : i32
    return %c0_i32, %c0_i32_0 : i32, i32
  }
  func.func @transform_4(%arg0: i32) -> (i32, i32) {
    %c0_i32 = arith.constant 0 : i32
    %c0_i32_0 = arith.constant 0 : i32
    return %c0_i32, %arg0 : i32, i32
  }
}

</mosaic_0001>

<llo_original>
// kernel: bc_spline_forward.1
$region0: #{bc_spline_forward.1}
  #allocation0 [shape = 'u32[]', space=smem, size = 0x4, offset = 0x4, fixed_abs, tag = 'smem constant byte address 0x4 - core index']
  #allocation1 [shape = 'u32[144,128]{1,0:T(1,128)}', space=vmem, size = 0x12000, scoped, tag = 'internal scratch']
  #allocation2 [shape = 'f32[1,1]{1,0:T(1,128)S(6)}', space=smem, size = 0x200, scoped, tag = 'scoped memory for bc_spline_forward.1']
  %s0 = inlined_call_operand.vmem [shape: s32[1,128], index: 0, kind: input, shape index: {}]
  %s1 = inlined_call_operand.vmem [shape: f32[8,128], index: 1, kind: input, shape index: {}]
  %s2 = inlined_call_operand.vmem [shape: bf16[96,48], index: 2, kind: input, shape index: {}]
  %s3 = inlined_call_operand.<no memory space> [shape: f32[1,1], index: 3, kind: input, shape index: {}]
  %s4 = inlined_call_operand.vmem [shape: f32[1,128], index: 4, kind: output, shape index: {}]
  %s5 = sld [smem:[#allocation0]]
  $region26: #{bc_spline_forward.1} parent=0
    _
  %s7 = ssub.s32 1, %s5
  %s8 = scalar_select 0, %s7, %s5
  %9 = sst [smem:[#allocation2]] %s3
  // Predicated region
  $region2: #{bc_spline_forward.1} parent=0 // pred_check
    _
  $region3: #{bc_spline_forward.1} parent=0 // pred_check_branch
    %11 = sbr.rel (0) target = $region5
  $region4: #{bc_spline_forward.1} parent=0 // pred_region
    _
  $region5: #{bc_spline_forward.1} parent=0 // pred_fallthru
    _
  // Predicated region
  $region6: #{bc_spline_forward.1} parent=0 // pred_check
    _
  $region7: #{bc_spline_forward.1} parent=0 // pred_check_branch
    %13 = sbr.rel (0) target = $region9
  $region8: #{bc_spline_forward.1} parent=0 // pred_region
    _
  $region9: #{bc_spline_forward.1} parent=0 // pred_fallthru
    _
  // Predicated region
  $region10: #{bc_spline_forward.1} parent=0 // pred_check
    _
  $region11: #{bc_spline_forward.1} parent=0 // pred_check_branch
    %15 = sbr.rel (0) target = $region13
  $region12: #{bc_spline_forward.1} parent=0 // pred_region
    _
  $region13: #{bc_spline_forward.1} parent=0 // pred_fallthru
    _
  // Predicated region
  $region14: #{bc_spline_forward.1} parent=0 // pred_check
    _
  $region15: #{bc_spline_forward.1} parent=0 // pred_check_branch
    %17 = sbr.rel (0) target = $region17
  $region16: #{bc_spline_forward.1} parent=0 // pred_region
    _
  $region17: #{bc_spline_forward.1} parent=0 // pred_fallthru
    _
  %s19 = sld [smem:[#allocation2]]
  %v20 = vlaneseq
  %v21 = vshrl.u32 %v20, 7
  %v22 = vadd.s32 %v21, 8
  %v23 = vadd.s32 %v21, 16
  %v24 = vadd.s32 %v21, 24
  %v25 = vadd.s32 %v21, 32
  %v26 = vadd.s32 %v21, 40
  %v27 = vld [vmem:[%s1] sm:$0xff]
  %v28 = vld [vmem:[%s0] sm:$0x1]
  %v29 = vlaneseq
  %v30 = vshrl.u32 %v29, 7
  %v31 = vsub.s32 0, %v30
  %v32 = vrot.slane %v28, %v31
  %vm33 = vcmp.eq.s32.totalorder %v21, %v32
  %vm34 = vcmp.eq.s32.totalorder %v22, %v32
  %vm35 = vcmp.eq.s32.totalorder %v23, %v32
  %vm36 = vcmp.eq.s32.totalorder %v24, %v32
  %vm37 = vcmp.eq.s32.totalorder %v25, %v32
  %vm38 = vcmp.eq.s32.totalorder %v26, %v32
  %v39 = vsel %vm33, 1, 0
  %v40 = vsel %vm34, 1, 0
  %v41 = vsel %vm35, 1, 0
  %v42 = vsel %vm36, 1, 0
  %v43 = vsel %vm37, 1, 0
  %v44 = vsel %vm38, 1, 0
  %v45 = vcvt.s32.f32 %v39
  %v46 = vcvt.s32.f32 %v40
  %v47 = vcvt.s32.f32 %v41
  %v48 = vcvt.s32.f32 %v42
  %v49 = vcvt.s32.f32 %v43
  %v50 = vcvt.s32.f32 %v44
  %v51 = vpack.c.bf16 %v46, %v45
  %v52 = vpack.c.bf16 %v48, %v47
  %v53 = vpack.c.bf16 %v50, %v49
  %vm54 = vcmp.ge.f32.partialorder %v27, -3.0
  %vm55 = vcmp.ge.f32.partialorder %v27, -2.3333333
  %vm56 = vcmp.ge.f32.partialorder %v27, -1.6666666
  %vm57 = vcmp.ge.f32.partialorder %v27, -1.0
  %vm58 = vcmp.ge.f32.partialorder %v27, -0.33333334
  %vm59 = vcmp.ge.f32.partialorder %v27, 0.33333334
  %vm60 = vcmp.ge.f32.partialorder %v27, 1.0
  %vm61 = vcmp.ge.f32.partialorder %v27, 1.6666666
  %vm62 = vcmp.ge.f32.partialorder %v27, 2.3333333
  %vm63 = vcmp.ge.f32.partialorder %v27, 3.0
  %vm64 = vmxor %vm55, 1
  %vm65 = vmand %vm54, %vm64
  %vm66 = vmxor %vm56, 1
  %vm67 = vmand %vm55, %vm66
  %vm68 = vmxor %vm57, 1
  %vm69 = vmand %vm56, %vm68
  %vm70 = vmxor %vm58, 1
  %vm71 = vmand %vm57, %vm70
  %vm72 = vmxor %vm59, 1
  %vm73 = vmand %vm58, %vm72
  %vm74 = vmxor %vm60, 1
  %vm75 = vmand %vm59, %vm74
  %vm76 = vmxor %vm61, 1
  %vm77 = vmand %vm60, %vm76
  %vm78 = vmxor %vm62, 1
  %vm79 = vmand %vm61, %vm78
  %vm80 = vmxor %vm63, 1
  %vm81 = vmand %vm62, %vm80
  %v82 = vmul.f32 %v27, 1.5
  %v83 = vadd.f32 %v82, 4.5
  %v84 = vadd.f32 %v82, 3.5
  %v85 = vadd.f32 %v82, 2.5
  %v86 = vadd.f32 %v82, 1.5
  %v87 = vadd.f32 %v82, 0.5
  %v88 = vadd.f32 %v82, -0.5
  %v89 = vadd.f32 %v82, -1.5
  %v90 = vadd.f32 %v82, -2.5
  %v91 = vadd.f32 %v82, -3.5
  %v92 = vsel %vm65, %v83, 0.0
  %v93 = vsub.f32 1.0, %v84
  %v94 = vsel %vm67, %v93, 0.0
  %v95 = vadd.f32 %v92, %v94
  %v96 = vsel %vm67, %v84, 0.0
  %v97 = vsub.f32 1.0, %v85
  %v98 = vsel %vm69, %v97, 0.0
  %v99 = vadd.f32 %v96, %v98
  %v100 = vsel %vm69, %v85, 0.0
  %v101 = vsub.f32 1.0, %v86
  %v102 = vsel %vm71, %v101, 0.0
  %v103 = vadd.f32 %v100, %v102
  %v104 = vsel %vm71, %v86, 0.0
  %v105 = vsub.f32 1.0, %v87
  %v106 = vsel %vm73, %v105, 0.0
  %v107 = vadd.f32 %v104, %v106
  %v108 = vsel %vm73, %v87, 0.0
  %v109 = vsub.f32 1.0, %v88
  %v110 = vsel %vm75, %v109, 0.0
  %v111 = vadd.f32 %v108, %v110
  %v112 = vsel %vm75, %v88, 0.0
  %v113 = vsub.f32 1.0, %v89
  %v114 = vsel %vm77, %v113, 0.0
  %v115 = vadd.f32 %v112, %v114
  %v116 = vsel %vm77, %v89, 0.0
  %v117 = vsub.f32 1.0, %v90
  %v118 = vsel %vm79, %v117, 0.0
  %v119 = vadd.f32 %v116, %v118
  %v120 = vsel %vm79, %v90, 0.0
  %v121 = vsub.f32 1.0, %v91
  %v122 = vsel %vm81, %v121, 0.0
  %v123 = vadd.f32 %v120, %v122
  %v124 = vmul.f32 %v27, 0.75
  %v125 = vadd.f32 %v124, 2.25
  %v126 = vadd.f32 %v124, 1.75
  %v127 = vadd.f32 %v124, 1.25
  %v128 = vadd.f32 %v124, 0.75
  %v129 = vadd.f32 %v124, 0.25
  %v130 = vadd.f32 %v124, -0.25
  %v131 = vadd.f32 %v124, -0.75
  %v132 = vadd.f32 %v124, -1.25
  %v133 = vmul.f32 %v125, %v95
  %v134 = vsub.f32 1.0, %v126
  %v135 = vmul.f32 %v134, %v99
  %v136 = vadd.f32 %v133, %v135
  %v137 = vmul.f32 %v126, %v99
  %v138 = vsub.f32 1.0, %v127
  %v139 = vmul.f32 %v138, %v103
  %v140 = vadd.f32 %v137, %v139
  %v141 = vmul.f32 %v127, %v103
  %v142 = vsub.f32 1.0, %v128
  %v143 = vmul.f32 %v142, %v107
  %v144 = vadd.f32 %v141, %v143
  %v145 = vmul.f32 %v128, %v107
  %v146 = vsub.f32 1.0, %v129
  %v147 = vmul.f32 %v146, %v111
  %v148 = vadd.f32 %v145, %v147
  %v149 = vmul.f32 %v129, %v111
  %v150 = vsub.f32 1.0, %v130
  %v151 = vmul.f32 %v150, %v115
  %v152 = vadd.f32 %v149, %v151
  %v153 = vmul.f32 %v130, %v115
  %v154 = vsub.f32 1.0, %v131
  %v155 = vmul.f32 %v154, %v119
  %v156 = vadd.f32 %v153, %v155
  %v157 = vmul.f32 %v131, %v119
  %v158 = vsub.f32 1.0, %v132
  %v159 = vmul.f32 %v158, %v123
  %v160 = vadd.f32 %v157, %v159
  %v161 = vmul.f32 %v27, 0.5
  %v162 = vadd.f32 %v161, 1.5
  %v163 = vadd.f32 %v161, 1.1666666
  %v164 = vadd.f32 %v161, 0.8333333
  %v165 = vadd.f32 %v161, 0.5
  %v166 = vadd.f32 %v161, 0.16666667
  %v167 = vadd.f32 %v161, -0.16666667
  %v168 = vadd.f32 %v161, -0.5
  %v169 = vmul.f32 %v162, %v136
  %v170 = vsub.f32 1.0, %v163
  %v171 = vmul.f32 %v170, %v140
  %v172 = vadd.f32 %v169, %v171
  %v173 = vmul.f32 %v163, %v140
  %v174 = vsub.f32 1.0, %v164
  %v175 = vmul.f32 %v174, %v144
  %v176 = vadd.f32 %v173, %v175
  %v177 = vmul.f32 %v164, %v144
  %v178 = vsub.f32 1.0, %v165
  %v179 = vmul.f32 %v178, %v148
  %v180 = vadd.f32 %v177, %v179
  %v181 = vmul.f32 %v165, %v148
  %v182 = vsub.f32 1.0, %v166
  %v183 = vmul.f32 %v182, %v152
  %v184 = vadd.f32 %v181, %v183
  %v185 = vmul.f32 %v166, %v152
  %v186 = vsub.f32 1.0, %v167
  %v187 = vmul.f32 %v186, %v156
  %v188 = vadd.f32 %v185, %v187
  %v189 = vmul.f32 %v167, %v156
  %v190 = vsub.f32 1.0, %v168
  %v191 = vmul.f32 %v190, %v160
  %v192 = vadd.f32 %v189, %v191
  %v193 = vtanh.pop %v161
  %v194 = vmul.f32 %v193, 0.5
  %v195 = vadd.f32 %v194, 0.5
  %v196 = vstv %s19
  %v197 = vmul.f32 %v196, %v27
  %v198 = vmul.f32 %v197, %v195
  %v199 = vld [vmem:[%s2] sm:$0xf]
  %v200 = vld [vmem:[%s2 + $0x4] sm:$0xf]
  %v203 = vunpack.c.l.b16 %v199
  %v204 = vunpack.c.l.b16 %v200
  %v205 = vpack.c.b16 %v204, %v203
  %vm206 = vcmask 392192
  %v208 = vsel %vm206, %v205, 0
  %210 = vmatprep.subr.bf16.mxu0 0
  %211 = vmatpush1.bf16.msra.mxu0 %v51
  %212 = vmatprep.subr.bf16.mxu0 0
  %213 = vmatpush1.bf16.msra.mxu0 %v52
  %214 = vmatprep.subr.bf16.mxu0 0
  %215 = vmatpush1.bf16.msra.mxu0 %v53
  %216 = vmatprep.subr.bf16.mxu0 0
  %217 = vmatpush1.bf16.msra.mxu0 0
  %218 = vmatprep.subr.bf16.mxu0 0
  %219 = vmatpush1.bf16.msra.mxu0 0
  %220 = vmatprep.subr.bf16.mxu0 0
  %221 = vmatpush1.bf16.msra.mxu0 0
  %222 = vmatprep.subr.bf16.mxu0 0
  %223 = vmatpush1.bf16.msra.mxu0 0
  %224 = vmatprep.subr.bf16.mxu0 0
  %225 = vmatpush1.bf16.msra.mxu0 0
  %226 = vmatprep.subr.bf16.mxu0 0
  %227 = vmatpush1.bf16.msra.mxu0 0
  %228 = vmatprep.subr.bf16.mxu0 0
  %229 = vmatpush1.bf16.msra.mxu0 0
  %230 = vmatprep.subr.bf16.mxu0 0
  %231 = vmatpush1.bf16.msra.mxu0 0
  %232 = vmatprep.subr.bf16.mxu0 0
  %233 = vmatpush1.bf16.msra.mxu0 0
  %234 = vmatprep.subr.bf16.mxu0 0
  %235 = vmatpush1.bf16.msra.mxu0 0
  %236 = vmatprep.subr.bf16.mxu0 0
  %237 = vmatpush1.bf16.msra.mxu0 0
  %238 = vmatprep.subr.bf16.mxu0 0
  %239 = vmatpush1.bf16.msra.mxu0 0
  %240 = vmatprep.subr.bf16.mxu0 0
  %241 = vmatpush1.bf16.msra.mxu0 0
  %242 = vmatprep.mubr.bf16.mxu0 0
  %243 = vmatmul.mubr.bf16.gmra.mrb[0].mxu0 %v208
  %v244 = vpop.f32.mrb[0].mxu0
  %v245 = vadd.f32 0.0, %v244
  %v246 = vpop.f32.mrb[0].mxu0
  %v247 = vpop.f32.mrb[0].mxu0
  %v248 = vadd.f32 0.0, %v247
  %v249 = vpop.f32.mrb[0].mxu0
  %250 = vdwg.mxu0
  %v251 = vadd.f32 %v245, %v248
  %v252 = vmul.f32 %v172, %v251
  %v253 = vadd.f32 %v198, %v252
  %v254 = vld [vmem:[%s2 + $0x8] sm:$0xf]
  %v255 = vld [vmem:[%s2 + $0xc] sm:$0xf]
  %v258 = vunpack.c.l.b16 %v254
  %v259 = vunpack.c.l.b16 %v255
  %v260 = vpack.c.b16 %v259, %v258
  %v262 = vsel %vm206, %v260, 0
  %264 = vmatprep.subr.bf16.mxu0 0
  %265 = vmatpush1.bf16.msra.mxu0 %v51
  %266 = vmatprep.subr.bf16.mxu0 0
  %267 = vmatpush1.bf16.msra.mxu0 %v52
  %268 = vmatprep.subr.bf16.mxu0 0
  %269 = vmatpush1.bf16.msra.mxu0 %v53
  %270 = vmatprep.subr.bf16.mxu0 0
  %271 = vmatpush1.bf16.msra.mxu0 0
  %272 = vmatprep.subr.bf16.mxu0 0
  %273 = vmatpush1.bf16.msra.mxu0 0
  %274 = vmatprep.subr.bf16.mxu0 0
  %275 = vmatpush1.bf16.msra.mxu0 0
  %276 = vmatprep.subr.bf16.mxu0 0
  %277 = vmatpush1.bf16.msra.mxu0 0
  %278 = vmatprep.subr.bf16.mxu0 0
  %279 = vmatpush1.bf16.msra.mxu0 0
  %280 = vmatprep.subr.bf16.mxu0 0
  %281 = vmatpush1.bf16.msra.mxu0 0
  %282 = vmatprep.subr.bf16.mxu0 0
  %283 = vmatpush1.bf16.msra.mxu0 0
  %284 = vmatprep.subr.bf16.mxu0 0
  %285 = vmatpush1.bf16.msra.mxu0 0
  %286 = vmatprep.subr.bf16.mxu0 0
  %287 = vmatpush1.bf16.msra.mxu0 0
  %288 = vmatprep.subr.bf16.mxu0 0
  %289 = vmatpush1.bf16.msra.mxu0 0
  %290 = vmatprep.subr.bf16.mxu0 0
  %291 = vmatpush1.bf16.msra.mxu0 0
  %292 = vmatprep.subr.bf16.mxu0 0
  %293 = vmatpush1.bf16.msra.mxu0 0
  %294 = vmatprep.subr.bf16.mxu0 0
  %295 = vmatpush1.bf16.msra.mxu0 0
  %296 = vmatprep.mubr.bf16.mxu0 0
  %297 = vmatmul.mubr.bf16.gmra.mrb[0].mxu0 %v262
  %v298 = vpop.f32.mrb[0].mxu0
  %v299 = vadd.f32 0.0, %v298
  %v300 = vpop.f32.mrb[0].mxu0
  %v301 = vpop.f32.mrb[0].mxu0
  %v302 = vadd.f32 0.0, %v301
  %v303 = vpop.f32.mrb[0].mxu0
  %304 = vdwg.mxu0
  %v305 = vadd.f32 %v299, %v302
  %v306 = vmul.f32 %v176, %v305
  %v307 = vadd.f32 %v253, %v306
  %v308 = vld [vmem:[%s2 + $0x10] sm:$0xf]
  %v309 = vld [vmem:[%s2 + $0x14] sm:$0xf]
  %v312 = vunpack.c.l.b16 %v308
  %v313 = vunpack.c.l.b16 %v309
  %v314 = vpack.c.b16 %v313, %v312
  %v316 = vsel %vm206, %v314, 0
  %318 = vmatprep.subr.bf16.mxu0 0
  %319 = vmatpush1.bf16.msra.mxu0 %v51
  %320 = vmatprep.subr.bf16.mxu0 0
  %321 = vmatpush1.bf16.msra.mxu0 %v52
  %322 = vmatprep.subr.bf16.mxu0 0
  %323 = vmatpush1.bf16.msra.mxu0 %v53
  %324 = vmatprep.subr.bf16.mxu0 0
  %325 = vmatpush1.bf16.msra.mxu0 0
  %326 = vmatprep.subr.bf16.mxu0 0
  %327 = vmatpush1.bf16.msra.mxu0 0
  %328 = vmatprep.subr.bf16.mxu0 0
  %329 = vmatpush1.bf16.msra.mxu0 0
  %330 = vmatprep.subr.bf16.mxu0 0
  %331 = vmatpush1.bf16.msra.mxu0 0
  %332 = vmatprep.subr.bf16.mxu0 0
  %333 = vmatpush1.bf16.msra.mxu0 0
  %334 = vmatprep.subr.bf16.mxu0 0
  %335 = vmatpush1.bf16.msra.mxu0 0
  %336 = vmatprep.subr.bf16.mxu0 0
  %337 = vmatpush1.bf16.msra.mxu0 0
  %338 = vmatprep.subr.bf16.mxu0 0
  %339 = vmatpush1.bf16.msra.mxu0 0
  %340 = vmatprep.subr.bf16.mxu0 0
  %341 = vmatpush1.bf16.msra.mxu0 0
  %342 = vmatprep.subr.bf16.mxu0 0
  %343 = vmatpush1.bf16.msra.mxu0 0
  %344 = vmatprep.subr.bf16.mxu0 0
  %345 = vmatpush1.bf16.msra.mxu0 0
  %346 = vmatprep.subr.bf16.mxu0 0
  %347 = vmatpush1.bf16.msra.mxu0 0
  %348 = vmatprep.subr.bf16.mxu0 0
  %349 = vmatpush1.bf16.msra.mxu0 0
  %350 = vmatprep.mubr.bf16.mxu0 0
  %351 = vmatmul.mubr.bf16.gmra.mrb[0].mxu0 %v316
  %v352 = vpop.f32.mrb[0].mxu0
  %v353 = vadd.f32 0.0, %v352
  %v354 = vpop.f32.mrb[0].mxu0
  %v355 = vpop.f32.mrb[0].mxu0
  %v356 = vadd.f32 0.0, %v355
  %v357 = vpop.f32.mrb[0].mxu0
  %358 = vdwg.mxu0
  %v359 = vadd.f32 %v353, %v356
  %v360 = vmul.f32 %v180, %v359
  %v361 = vadd.f32 %v307, %v360
  %v362 = vld [vmem:[%s2 + $0x18] sm:$0xf]
  %v363 = vld [vmem:[%s2 + $0x1c] sm:$0xf]
  %v366 = vunpack.c.l.b16 %v362
  %v367 = vunpack.c.l.b16 %v363
  %v368 = vpack.c.b16 %v367, %v366
  %v370 = vsel %vm206, %v368, 0
  %372 = vmatprep.subr.bf16.mxu0 0
  %373 = vmatpush1.bf16.msra.mxu0 %v51
  %374 = vmatprep.subr.bf16.mxu0 0
  %375 = vmatpush1.bf16.msra.mxu0 %v52
  %376 = vmatprep.subr.bf16.mxu0 0
  %377 = vmatpush1.bf16.msra.mxu0 %v53
  %378 = vmatprep.subr.bf16.mxu0 0
  %379 = vmatpush1.bf16.msra.mxu0 0
  %380 = vmatprep.subr.bf16.mxu0 0
  %381 = vmatpush1.bf16.msra.mxu0 0
  %382 = vmatprep.subr.bf16.mxu0 0
  %383 = vmatpush1.bf16.msra.mxu0 0
  %384 = vmatprep.subr.bf16.mxu0 0
  %385 = vmatpush1.bf16.msra.mxu0 0
  %386 = vmatprep.subr.bf16.mxu0 0
  %387 = vmatpush1.bf16.msra.mxu0 0
  %388 = vmatprep.subr.bf16.mxu0 0
  %389 = vmatpush1.bf16.msra.mxu0 0
  %390 = vmatprep.subr.bf16.mxu0 0
  %391 = vmatpush1.bf16.msra.mxu0 0
  %392 = vmatprep.subr.bf16.mxu0 0
  %393 = vmatpush1.bf16.msra.mxu0 0
  %394 = vmatprep.subr.bf16.mxu0 0
  %395 = vmatpush1.bf16.msra.mxu0 0
  %396 = vmatprep.subr.bf16.mxu0 0
  %397 = vmatpush1.bf16.msra.mxu0 0
  %398 = vmatprep.subr.bf16.mxu0 0
  %399 = vmatpush1.bf16.msra.mxu0 0
  %400 = vmatprep.subr.bf16.mxu0 0
  %401 = vmatpush1.bf16.msra.mxu0 0
  %402 = vmatprep.subr.bf16.mxu0 0
  %403 = vmatpush1.bf16.msra.mxu0 0
  %404 = vmatprep.mubr.bf16.mxu0 0
  %405 = vmatmul.mubr.bf16.gmra.mrb[0].mxu0 %v370
  %v406 = vpop.f32.mrb[0].mxu0
  %v407 = vadd.f32 0.0, %v406
  %v408 = vpop.f32.mrb[0].mxu0
  %v409 = vpop.f32.mrb[0].mxu0
  %v410 = vadd.f32 0.0, %v409
  %v411 = vpop.f32.mrb[0].mxu0
  %412 = vdwg.mxu0
  %v413 = vadd.f32 %v407, %v410
  %v414 = vmul.f32 %v184, %v413
  %v415 = vadd.f32 %v361, %v414
  %v416 = vld [vmem:[%s2 + $0x20] sm:$0xf]
  %v417 = vld [vmem:[%s2 + $0x24] sm:$0xf]
  %v420 = vunpack.c.l.b16 %v416
  %v421 = vunpack.c.l.b16 %v417
  %v422 = vpack.c.b16 %v421, %v420
  %v424 = vsel %vm206, %v422, 0
  %426 = vmatprep.subr.bf16.mxu0 0
  %427 = vmatpush1.bf16.msra.mxu0 %v51
  %428 = vmatprep.subr.bf16.mxu0 0
  %429 = vmatpush1.bf16.msra.mxu0 %v52
  %430 = vmatprep.subr.bf16.mxu0 0
  %431 = vmatpush1.bf16.msra.mxu0 %v53
  %432 = vmatprep.subr.bf16.mxu0 0
  %433 = vmatpush1.bf16.msra.mxu0 0
  %434 = vmatprep.subr.bf16.mxu0 0
  %435 = vmatpush1.bf16.msra.mxu0 0
  %436 = vmatprep.subr.bf16.mxu0 0
  %437 = vmatpush1.bf16.msra.mxu0 0
  %438 = vmatprep.subr.bf16.mxu0 0
  %439 = vmatpush1.bf16.msra.mxu0 0
  %440 = vmatprep.subr.bf16.mxu0 0
  %441 = vmatpush1.bf16.msra.mxu0 0
  %442 = vmatprep.subr.bf16.mxu0 0
  %443 = vmatpush1.bf16.msra.mxu0 0
  %444 = vmatprep.subr.bf16.mxu0 0
  %445 = vmatpush1.bf16.msra.mxu0 0
  %446 = vmatprep.subr.bf16.mxu0 0
  %447 = vmatpush1.bf16.msra.mxu0 0
  %448 = vmatprep.subr.bf16.mxu0 0
  %449 = vmatpush1.bf16.msra.mxu0 0
  %450 = vmatprep.subr.bf16.mxu0 0
  %451 = vmatpush1.bf16.msra.mxu0 0
  %452 = vmatprep.subr.bf16.mxu0 0
  %453 = vmatpush1.bf16.msra.mxu0 0
  %454 = vmatprep.subr.bf16.mxu0 0
  %455 = vmatpush1.bf16.msra.mxu0 0
  %456 = vmatprep.subr.bf16.mxu0 0
  %457 = vmatpush1.bf16.msra.mxu0 0
  %458 = vmatprep.mubr.bf16.mxu0 0
  %459 = vmatmul.mubr.bf16.gmra.mrb[0].mxu0 %v424
  %v460 = vpop.f32.mrb[0].mxu0
  %v461 = vadd.f32 0.0, %v460
  %v462 = vpop.f32.mrb[0].mxu0
  %v463 = vpop.f32.mrb[0].mxu0
  %v464 = vadd.f32 0.0, %v463
  %v465 = vpop.f32.mrb[0].mxu0
  %466 = vdwg.mxu0
  %v467 = vadd.f32 %v461, %v464
  %v468 = vmul.f32 %v188, %v467
  %v469 = vadd.f32 %v415, %v468
  %v470 = vld [vmem:[%s2 + $0x28] sm:$0xf]
  %v471 = vld [vmem:[%s2 + $0x2c] sm:$0xf]
  %v474 = vunpack.c.l.b16 %v470
  %v475 = vunpack.c.l.b16 %v471
  %v476 = vpack.c.b16 %v475, %v474
  %v478 = vsel %vm206, %v476, 0
  %480 = vmatprep.subr.bf16.mxu0 0
  %481 = vmatpush1.bf16.msra.mxu0 %v51
  %482 = vmatprep.subr.bf16.mxu0 0
  %483 = vmatpush1.bf16.msra.mxu0 %v52
  %484 = vmatprep.subr.bf16.mxu0 0
  %485 = vmatpush1.bf16.msra.mxu0 %v53
  %486 = vmatprep.subr.bf16.mxu0 0
  %487 = vmatpush1.bf16.msra.mxu0 0
  %488 = vmatprep.subr.bf16.mxu0 0
  %489 = vmatpush1.bf16.msra.mxu0 0
  %490 = vmatprep.subr.bf16.mxu0 0
  %491 = vmatpush1.bf16.msra.mxu0 0
  %492 = vmatprep.subr.bf16.mxu0 0
  %493 = vmatpush1.bf16.msra.mxu0 0
  %494 = vmatprep.subr.bf16.mxu0 0
  %495 = vmatpush1.bf16.msra.mxu0 0
  %496 = vmatprep.subr.bf16.mxu0 0
  %497 = vmatpush1.bf16.msra.mxu0 0
  %498 = vmatprep.subr.bf16.mxu0 0
  %499 = vmatpush1.bf16.msra.mxu0 0
  %500 = vmatprep.subr.bf16.mxu0 0
  %501 = vmatpush1.bf16.msra.mxu0 0
  %502 = vmatprep.subr.bf16.mxu0 0
  %503 = vmatpush1.bf16.msra.mxu0 0
  %504 = vmatprep.subr.bf16.mxu0 0
  %505 = vmatpush1.bf16.msra.mxu0 0
  %506 = vmatprep.subr.bf16.mxu0 0
  %507 = vmatpush1.bf16.msra.mxu0 0
  %508 = vmatprep.subr.bf16.mxu0 0
  %509 = vmatpush1.bf16.msra.mxu0 0
  %510 = vmatprep.subr.bf16.mxu0 0
  %511 = vmatpush1.bf16.msra.mxu0 0
  %512 = vmatprep.mubr.bf16.mxu0 0
  %513 = vmatmul.mubr.bf16.gmra.mrb[0].mxu0 %v478
  %v514 = vpop.f32.mrb[0].mxu0
  %v515 = vadd.f32 0.0, %v514
  %v516 = vpop.f32.mrb[0].mxu0
  %v517 = vpop.f32.mrb[0].mxu0
  %v518 = vadd.f32 0.0, %v517
  %v519 = vpop.f32.mrb[0].mxu0
  %520 = vdwg.mxu0
  %v521 = vadd.f32 %v515, %v518
  %v522 = vmul.f32 %v192, %v521
  %v523 = vadd.f32 %v469, %v522
  %v524 = vrot.slane %v523, 4
  %v525 = vadd.f32 %v523, %v524
  %v526 = vrot.slane %v525, 2
  %v527 = vadd.f32 %v525, %v526
  %v528 = vrot.slane %v527, 1
  %v529 = vadd.f32 %v527, %v528
  %v530 = vmax.f32 %v529, 0.0
  %531 = vst [vmem:[%s4] sm:$0x1] %v530
  // Predicated region
  $region18: #{bc_spline_forward.1} parent=0 // pred_check
    _
  $region19: #{bc_spline_forward.1} parent=0 // pred_check_branch
    %533 = sbr.rel (0) target = $region21
  $region20: #{bc_spline_forward.1} parent=0 // pred_region
    _
  $region21: #{bc_spline_forward.1} parent=0 // pred_fallthru
    _
  // Predicated region
  $region22: #{bc_spline_forward.1} parent=0 // pred_check
    _
  $region23: #{bc_spline_forward.1} parent=0 // pred_check_branch
    %535 = sbr.rel (0) target = $region25
  $region24: #{bc_spline_forward.1} parent=0 // pred_region
    _
  $region25: #{bc_spline_forward.1} parent=0 // pred_fallthru
    _

</llo_original>
